<compile_context>
chip_gen: v7x
topology: tpu7x:2x2x1
jax: 0.10.0
libtpu: 0.0.40
codegen_flags: <defaults>
</compile_context>

<pallas_src>
import functools

import jax
import jax.numpy as jnp
from jax import lax
from jax.experimental import pallas as pl
from jax.experimental.pallas import tpu as pltpu


# ---------------------------------------------------------------------------
# Config (small, synthetic — mirrors the shapes implied by the module __init__)
# ---------------------------------------------------------------------------
VOCAB_SIZE = 64          # config.vocab_size
TYPE_VOCAB_SIZE = 2      # config.type_vocab_size
HIDDEN_SIZE = 128        # config.hidden_size
PAD_TOKEN_ID = 1         # config.pad_token_id (embedding row zeroed, like nn.Embedding)
LAYER_NORM_EPS = 1e-5    # config.layer_norm_eps
# config.hidden_dropout_prob -> dropout is identity in eval mode.

BATCH = 2
SEQ = 8
TILE_T = 8               # token-tile (sublane multiple); >=2 grid steps for megacore


# ---------------------------------------------------------------------------
# Pallas kernel: embedding gather + add + LayerNorm for one token tile
# ---------------------------------------------------------------------------
def _embeddings_kernel(ids_ref, tt_ref, wemb_ref, temb_ref, gamma_ref, beta_ref,
                       out_ref, *, eps):
    # ids_ref, tt_ref    : (TILE_T, 1) int32
    # wemb_ref           : (V, H)  bf16   (pinned across grid)
    # temb_ref           : (TV, H) f32    (pinned across grid)
    # gamma_ref/beta_ref : (1, H)  f32
    # out_ref            : (TILE_T, H) f32
    tile_t = ids_ref.shape[0]
    V, H = wemb_ref.shape
    TV = temb_ref.shape[0]

    ids = ids_ref[...]                                        # (TILE_T, 1)
    tt = tt_ref[...]                                          # (TILE_T, 1)

    # Word-embedding gather: bf16 one-hot @ bf16 table, f32 accumulate (MXU).
    # Note: out-of-range ids produce an all-zero row (no clamp like jnp.take).
    vocab_iota = lax.broadcasted_iota(jnp.int32, (tile_t, V), 1)
    onehot_w = (vocab_iota == ids).astype(jnp.bfloat16)       # (TILE_T, V)
    x = jnp.dot(onehot_w, wemb_ref[...],
                preferred_element_type=jnp.float32)           # (TILE_T, H) f32

    # Token-type embedding: tiny vocab -> VPU select chain (no MXU push/pop).
    temb = temb_ref[...].astype(jnp.float32)                  # (TV, H)
    tt_emb = jnp.broadcast_to(temb[0, :][None, :], (tile_t, H))
    for t in range(1, TV):                                    # TV is small & static
        tt_emb = jnp.where(tt == t, temb[t, :][None, :], tt_emb)
    x = x + tt_emb

    # LayerNorm over hidden (lane) axis; fold gamma into the scale.
    mean = jnp.mean(x, axis=-1, keepdims=True)                # (TILE_T, 1)
    centered = x - mean
    var = jnp.mean(centered * centered, axis=-1, keepdims=True)
    scale = lax.rsqrt(var + eps) * gamma_ref[...]             # (TILE_T, H)
    y = centered * scale + beta_ref[...]

    # Dropout is identity in eval mode (training would use pltpu.prng_*).
    out_ref[...] = y.astype(out_ref.dtype)


def layout_mamba_text_embeddings(input_ids, token_type_ids, word_emb, type_emb,
                                 ln_gamma, ln_beta, *, eps=LAYER_NORM_EPS,
                                 tile_t=None):
    """input_ids, token_type_ids: (B, S) int32. Returns (B, S, H) float32.

    word_emb may be bf16 (recommended) or f32 — it is passed to the kernel in
    its native dtype (no wrapper-side cast of the full table).
    """
    B, S = input_ids.shape
    V, H = word_emb.shape
    TV, _ = type_emb.shape
    T = B * S

    if tile_t is None:
        tile_t = min(256, T)
    tile_t = max(8, (tile_t // 8) * 8)
    num_tiles = pl.cdiv(T, tile_t)
    T_pad = num_tiles * tile_t

    ids2d = input_ids.reshape(T, 1).astype(jnp.int32)
    tt2d = token_type_ids.reshape(T, 1).astype(jnp.int32)
    if T_pad != T:
        ids2d = jnp.pad(ids2d, ((0, T_pad - T), (0, 0)))
        tt2d = jnp.pad(tt2d, ((0, T_pad - T), (0, 0)))

    gamma2d = ln_gamma.reshape(1, H).astype(jnp.float32)
    beta2d = ln_beta.reshape(1, H).astype(jnp.float32)

    kernel = functools.partial(_embeddings_kernel, eps=eps)

    out = pl.pallas_call(
        kernel,
        out_shape=jax.ShapeDtypeStruct((T_pad, H), jnp.float32),
        grid=(num_tiles,),
        in_specs=[
            pl.BlockSpec((tile_t, 1), lambda i: (i, 0)),     # input_ids tile
            pl.BlockSpec((tile_t, 1), lambda i: (i, 0)),     # token_type_ids tile
            pl.BlockSpec((V, H), lambda i: (0, 0)),          # word table (pinned)
            pl.BlockSpec((TV, H), lambda i: (0, 0)),         # token-type table (pinned)
            pl.BlockSpec((1, H), lambda i: (0, 0)),          # LayerNorm gamma
            pl.BlockSpec((1, H), lambda i: (0, 0)),          # LayerNorm beta
        ],
        out_specs=pl.BlockSpec((tile_t, H), lambda i: (i, 0)),
        compiler_params=pltpu.CompilerParams(
            dimension_semantics=("parallel",)),
    )(ids2d, tt2d, word_emb, type_emb.astype(jnp.float32), gamma2d, beta2d)

    return out[:T].reshape(B, S, H)


# ---------------------------------------------------------------------------
# Pure-JAX reference (uses the same bf16 table for a like-for-like check)
# ---------------------------------------------------------------------------
def _reference(input_ids, token_type_ids, word_emb, type_emb, gamma, beta, eps):
    w = word_emb.astype(jnp.float32)
    t = type_emb.astype(jnp.float32)
    x = jnp.take(w, input_ids, axis=0) + jnp.take(t, token_type_ids, axis=0)
    mean = jnp.mean(x, axis=-1, keepdims=True)
    var = jnp.mean((x - mean) ** 2, axis=-1, keepdims=True)
    return (x - mean) * lax.rsqrt(var + eps) * gamma + beta


if __name__ == "__main__":
    key = jax.random.PRNGKey(0)
    k_w, k_t, k_g, k_b, k_ids, k_tt = jax.random.split(key, 6)

    # Parameters. Word table stored in bf16 (gather is bit-exact w.r.t. bf16
    # weights); padding row zeroed as nn.Embedding(padding_idx=...) does.
    word_emb_f32 = jax.random.normal(k_w, (VOCAB_SIZE, HIDDEN_SIZE), dtype=jnp.float32)
    word_emb_f32 = word_emb_f32.at[PAD_TOKEN_ID].set(0.0)
    word_emb = word_emb_f32.astype(jnp.bfloat16)
    type_emb = jax.random.normal(k_t, (TYPE_VOCAB_SIZE, HIDDEN_SIZE), dtype=jnp.float32)
    # Non-trivial LayerNorm affine params to exercise the gamma/beta path.
    ln_gamma = 1.0 + 0.1 * jax.random.normal(k_g, (HIDDEN_SIZE,), dtype=jnp.float32)
    ln_beta = 0.1 * jax.random.normal(k_b, (HIDDEN_SIZE,), dtype=jnp.float32)

    # Inputs.
    input_ids = jax.random.randint(k_ids, (BATCH, SEQ), 0, VOCAB_SIZE, dtype=jnp.int32)
    input_ids = input_ids.at[:, -1].set(PAD_TOKEN_ID)  # include some padding tokens
    token_type_ids = jax.random.randint(k_tt, (BATCH, SEQ), 0, TYPE_VOCAB_SIZE,
                                        dtype=jnp.int32)

    out = layout_mamba_text_embeddings(input_ids, token_type_ids, word_emb,
                                       type_emb, ln_gamma, ln_beta,
                                       tile_t=TILE_T)
    out = jax.block_until_ready(out)

    ref = _reference(input_ids, token_type_ids, word_emb, type_emb,
                     ln_gamma, ln_beta, LAYER_NORM_EPS)
    assert out.shape == (BATCH, SEQ, HIDDEN_SIZE)
    assert jnp.allclose(out, ref, atol=1e-4, rtol=1e-4), "mismatch vs reference"

    print("KERNEL_OK")
</pallas_src>

<mosaic_0001>
module attributes {stable_mosaic.version = 11 : i64} {
  func.func @_embeddings_kernel(%arg0: i32, %arg1: memref<8x1xi32, #tpu.memory_space<vmem>>, %arg2: memref<8x1xi32, #tpu.memory_space<vmem>>, %arg3: memref<64x128xbf16, #tpu.memory_space<vmem>>, %arg4: memref<2x128xf32, #tpu.memory_space<vmem>>, %arg5: memref<1x128xf32, #tpu.memory_space<vmem>>, %arg6: memref<1x128xf32, #tpu.memory_space<vmem>>, %arg7: memref<8x128xf32, #tpu.memory_space<vmem>>) attributes {dimension_semantics = [#tpu.dimension_semantics<parallel>], iteration_bounds = array<i64: 2>, scalar_prefetch = 0 : i64, scratch_operands = 0 : i64, tpu.core_type = #tpu.core_type<tc>, window_params = [{transform_indices = @transform_0, window_bounds = array<i64: 8, 1>}, {transform_indices = @transform_1, window_bounds = array<i64: 8, 1>}, {pipeline_mode = #tpu.pipeline_mode<synchronous>, transform_indices = @transform_2, window_bounds = array<i64: 64, 128>}, {pipeline_mode = #tpu.pipeline_mode<synchronous>, transform_indices = @transform_3, window_bounds = array<i64: 2, 128>}, {pipeline_mode = #tpu.pipeline_mode<synchronous>, transform_indices = @transform_4, window_bounds = array<i64: 1, 128>}, {pipeline_mode = #tpu.pipeline_mode<synchronous>, transform_indices = @transform_5, window_bounds = array<i64: 1, 128>}, {transform_indices = @transform_6, window_bounds = array<i64: 8, 128>}]} {
    %c0 = arith.constant 0 : index
    %c0_0 = arith.constant 0 : index
    %0 = vector.load %arg1[%c0, %c0_0] : memref<8x1xi32, #tpu.memory_space<vmem>>, vector<8x1xi32>
    %c0_1 = arith.constant 0 : index
    %c0_2 = arith.constant 0 : index
    %1 = vector.load %arg2[%c0_1, %c0_2] : memref<8x1xi32, #tpu.memory_space<vmem>>, vector<8x1xi32>
    %2 = tpu.iota {dimensions = array<i32: 1>} : vector<8x64xi32>
    %3 = vector.broadcast %0 : vector<8x1xi32> to vector<8x64xi32>
    %4 = arith.cmpi eq, %2, %3 : vector<8x64xi32>
    %5 = arith.extui %4 : vector<8x64xi1> to vector<8x64xi32>
    %6 = arith.sitofp %5 : vector<8x64xi32> to vector<8x64xf32>
    %7 = arith.truncf %6 : vector<8x64xf32> to vector<8x64xbf16>
    %c0_3 = arith.constant 0 : index
    %c0_4 = arith.constant 0 : index
    %8 = vector.load %arg3[%c0_3, %c0_4] : memref<64x128xbf16, #tpu.memory_space<vmem>>, vector<64x128xbf16>
    %cst = arith.constant dense<0.000000e+00> : vector<8x128xf32>
    %9 = tpu.matmul %7, %8, %cst {dimension_numbers = #tpu.dot_dimension_numbers<[1], [0], [0], [1], [0, 0, 1, 1], [], []>} : vector<8x64xbf16>, vector<64x128xbf16>, vector<8x128xf32> -> vector<8x128xf32>
    %c0_5 = arith.constant 0 : index
    %c0_6 = arith.constant 0 : index
    %10 = vector.load %arg4[%c0_5, %c0_6] : memref<2x128xf32, #tpu.memory_space<vmem>>, vector<2x128xf32>
    %11 = vector.extract_strided_slice %10 {offsets = [0, 0], sizes = [1, 128], strides = [1, 1]} : vector<2x128xf32> to vector<1x128xf32>
    %12 = vector.shape_cast %11 : vector<1x128xf32> to vector<128xf32>
    %13 = vector.shape_cast %12 : vector<128xf32> to vector<1x128xf32>
    %14 = vector.shape_cast %13 : vector<1x128xf32> to vector<1x128xf32>
    %15 = vector.broadcast %14 : vector<1x128xf32> to vector<8x128xf32>
    %c1_i32 = arith.constant 1 : i32
    %16 = vector.broadcast %c1_i32 : i32 to vector<8x1xi32>
    %17 = arith.cmpi eq, %1, %16 : vector<8x1xi32>
    %18 = vector.extract_strided_slice %10 {offsets = [1, 0], sizes = [1, 128], strides = [1, 1]} : vector<2x128xf32> to vector<1x128xf32>
    %19 = vector.shape_cast %18 : vector<1x128xf32> to vector<128xf32>
    %20 = vector.shape_cast %19 : vector<128xf32> to vector<1x128xf32>
    %21 = vector.shape_cast %17 : vector<8x1xi1> to vector<8x1xi1>
    %22 = vector.broadcast %21 : vector<8x1xi1> to vector<8x128xi1>
    %23 = vector.shape_cast %20 : vector<1x128xf32> to vector<1x128xf32>
    %24 = vector.broadcast %23 : vector<1x128xf32> to vector<8x128xf32>
    %25 = arith.select %22, %24, %15 : vector<8x128xi1>, vector<8x128xf32>
    %26 = arith.addf %9, %25 : vector<8x128xf32>
    %cst_7 = arith.constant dense<0.000000e+00> : vector<8xf32>
    %27 = vector.multi_reduction <add>, %26, %cst_7 [1] : vector<8x128xf32> to vector<8xf32>
    %28 = vector.shape_cast %27 : vector<8xf32> to vector<8x1xf32>
    %cst_8 = arith.constant 1.280000e+02 : f32
    %29 = vector.broadcast %cst_8 : f32 to vector<8x1xf32>
    %30 = arith.divf %28, %29 : vector<8x1xf32>
    %31 = vector.broadcast %30 : vector<8x1xf32> to vector<8x128xf32>
    %32 = arith.subf %26, %31 : vector<8x128xf32>
    %33 = arith.mulf %32, %32 : vector<8x128xf32>
    %cst_9 = arith.constant dense<0.000000e+00> : vector<8xf32>
    %34 = vector.multi_reduction <add>, %33, %cst_9 [1] : vector<8x128xf32> to vector<8xf32>
    %35 = vector.shape_cast %34 : vector<8xf32> to vector<8x1xf32>
    %cst_10 = arith.constant 1.280000e+02 : f32
    %36 = vector.broadcast %cst_10 : f32 to vector<8x1xf32>
    %37 = arith.divf %35, %36 : vector<8x1xf32>
    %cst_11 = arith.constant 9.99999974E-6 : f32
    %38 = vector.broadcast %cst_11 : f32 to vector<8x1xf32>
    %39 = arith.addf %37, %38 : vector<8x1xf32>
    %40 = math.rsqrt %39 : vector<8x1xf32>
    %c0_12 = arith.constant 0 : index
    %c0_13 = arith.constant 0 : index
    %41 = vector.load %arg5[%c0_12, %c0_13] : memref<1x128xf32, #tpu.memory_space<vmem>>, vector<1x128xf32>
    %42 = vector.broadcast %40 : vector<8x1xf32> to vector<8x128xf32>
    %43 = vector.broadcast %41 : vector<1x128xf32> to vector<8x128xf32>
    %44 = arith.mulf %42, %43 : vector<8x128xf32>
    %45 = arith.mulf %32, %44 : vector<8x128xf32>
    %c0_14 = arith.constant 0 : index
    %c0_15 = arith.constant 0 : index
    %46 = vector.load %arg6[%c0_14, %c0_15] : memref<1x128xf32, #tpu.memory_space<vmem>>, vector<1x128xf32>
    %47 = vector.broadcast %46 : vector<1x128xf32> to vector<8x128xf32>
    %48 = arith.addf %45, %47 : vector<8x128xf32>
    %c0_16 = arith.constant 0 : index
    %c0_17 = arith.constant 0 : index
    %49 = vector.load %arg7[%c0_16, %c0_17] : memref<8x128xf32, #tpu.memory_space<vmem>>, vector<8x128xf32>
    tpu.vector_store %arg7[%c0_16, %c0_17], %48 {strides = array<i32>} : memref<8x128xf32, #tpu.memory_space<vmem>>, vector<8x128xf32>,
    return
  }
  func.func @transform_0(%arg0: i32) -> (i32, i32) {
    %c0_i32 = arith.constant 0 : i32
    %c0_i32_0 = arith.constant 0 : i32
    return %arg0, %c0_i32 : i32, i32
  }
  func.func @transform_1(%arg0: i32) -> (i32, i32) {
    %c0_i32 = arith.constant 0 : i32
    %c0_i32_0 = arith.constant 0 : i32
    return %arg0, %c0_i32 : i32, i32
  }
  func.func @transform_2(%arg0: i32) -> (i32, i32) {
    %c0_i32 = arith.constant 0 : i32
    %c0_i32_0 = arith.constant 0 : i32
    %c0_i32_1 = arith.constant 0 : i32
    return %c0_i32, %c0_i32_0 : i32, i32
  }
  func.func @transform_3(%arg0: i32) -> (i32, i32) {
    %c0_i32 = arith.constant 0 : i32
    %c0_i32_0 = arith.constant 0 : i32
    %c0_i32_1 = arith.constant 0 : i32
    return %c0_i32, %c0_i32_0 : i32, i32
  }
  func.func @transform_4(%arg0: i32) -> (i32, i32) {
    %c0_i32 = arith.constant 0 : i32
    %c0_i32_0 = arith.constant 0 : i32
    %c0_i32_1 = arith.constant 0 : i32
    return %c0_i32, %c0_i32_0 : i32, i32
  }
  func.func @transform_5(%arg0: i32) -> (i32, i32) {
    %c0_i32 = arith.constant 0 : i32
    %c0_i32_0 = arith.constant 0 : i32
    %c0_i32_1 = arith.constant 0 : i32
    return %c0_i32, %c0_i32_0 : i32, i32
  }
  func.func @transform_6(%arg0: i32) -> (i32, i32) {
    %c0_i32 = arith.constant 0 : i32
    %c0_i32_0 = arith.constant 0 : i32
    return %arg0, %c0_i32 : i32, i32
  }
}

</mosaic_0001>

<llo_original>
// kernel: tpu_custom_call.1
$region0: #{tpu_custom_call.1}
  #allocation0 [shape = 'u32[]', space=smem, size = 0x4, offset = 0x4, fixed_abs, tag = 'smem constant byte address 0x4 - core index']
  #allocation1 [shape = 'u32[144,128]{1,0:T(1,128)}', space=vmem, size = 0x12000, scoped, tag = 'internal scratch']
  %s0 = inlined_call_operand.vmem [shape: s32[16,1], index: 0, kind: input, shape index: {}]
  %s1 = inlined_call_operand.vmem [shape: s32[16,1], index: 1, kind: input, shape index: {}]
  %s2 = inlined_call_operand.vmem [shape: bf16[64,128], index: 2, kind: input, shape index: {}]
  %s3 = inlined_call_operand.vmem [shape: f32[2,128], index: 3, kind: input, shape index: {}]
  %s4 = inlined_call_operand.vmem [shape: f32[1,128], index: 4, kind: input, shape index: {}]
  %s5 = inlined_call_operand.vmem [shape: f32[1,128], index: 5, kind: input, shape index: {}]
  %s6 = inlined_call_operand.hbm [shape: f32[16,128], index: 6, kind: output, shape index: {}]
  %s7 = sld [smem:[#allocation0]]
  $region57: #{tpu_custom_call.1} parent=0
    _
  %s9 = ssub.s32 1, %s7
  %s10 = scalar_select 0, %s9, %s7
  $region1: #{tpu_custom_call.1} parent=0
    #allocation2 [shape = 'u8[8192]{0}', space=vmem, size = 0x2000, scoped, tag = 'output window, operand 0']
    #allocation3 [shape = 's32[2]{0}', space=sflag, size = 0x8, scoped, tag = 'scoped memory for tpu_custom_call.1']
    %11 = vsyncpa [#allocation3], 0
    %s12 = scalar_lea.sflag [#allocation3], 1
    %13 = vsyncpa %s12, 0
    loop: start=0, step=1, limit=4
    $region2: #{tpu_custom_call.1} parent=1 // loop_pre_header
      _
    $region3: #{tpu_custom_call.1} parent=1 // loop_header
      %s15 = sphi 0, %s19
      %p16 = scmp.ge.s32.totalorder %s15, 4
      %s25 = sphi 0, %s27
      %s28 = sphi 0, %s25
      %s29 = sphi 0, %s28
      %s45 = sphi 0, %s29
      %s51 = sphi 0, %s53
      %s54 = sphi 0, %s51
      %s55 = sphi 0, %s54
      %s71 = sphi 0, %s55
      %s75 = sphi 0, %s75
      %s77 = sphi 0, %s75
      %s78 = sphi 0, %s77
      %s92 = sphi 0, %s78
      %s96 = sphi 0, %s96
      %s98 = sphi 0, %s96
      %s99 = sphi 0, %s98
      %s113 = sphi 0, %s99
      %s117 = sphi 0, %s117
      %s119 = sphi 0, %s117
      %s120 = sphi 0, %s119
      %s134 = sphi 0, %s120
      %s138 = sphi 0, %s138
      %s140 = sphi 0, %s138
      %s141 = sphi 0, %s140
      %s155 = sphi 0, %s141
      %s161 = sphi 0, %s163
      %s164 = sphi 0, %s161
      %s165 = sphi 0, %s164
      %s181 = sphi 0, %s165
    $region4: #{tpu_custom_call.1} parent=1 // loop_header_branch
      %18 = sbr.rel (%p16) target = $region8
    $region5: #{tpu_custom_call.1} parent=1 // loop_body
      %s20 = ssub.s32 %s15, 1
      %s21 = ssub.s32 %s15, 2
      %s22 = sadd.s32 %s15, 1
      %s23 = ssub.s32 %s15, %s22
      %p24 = scmp.eq.s32.totalorder %s23, 0
      %s26 = sadd.s32 %s25, 1
      %s27 = scalar_select %p24, %s25, %s26
      %p30 = pneg %p24
      %p31 = scmp.eq.s32.totalorder %s15, 1
      %p32 = por %p30, %p31
      %p33 = scmp.ne.s32.totalorder %s25, %s28
      %p34 = scmp.eq.s32.totalorder %s15, 0
      %p35 = por %p33, %p34
      %p36 = scmp.ne.s32.totalorder %s25, %s28
      %p37 = scmp.eq.s32.totalorder %s20, 1
      %p38 = por %p36, %p37
      %p39 = scmp.ne.s32.totalorder %s28, %s29
      %p40 = scmp.eq.s32.totalorder %s20, 0
      %p41 = por %p39, %p40
      %p42 = scmp.ne.s32.totalorder %s28, %s29
      %p43 = scmp.eq.s32.totalorder %s21, 1
      %p44 = por %p42, %p43
      %p46 = scmp.ne.s32.totalorder %s29, %s45
      %p47 = scmp.eq.s32.totalorder %s21, 0
      %p48 = por %p46, %p47
      %s49 = ssub.s32 %s15, %s22
      %p50 = scmp.eq.s32.totalorder %s49, 0
      %s52 = sadd.s32 %s51, 1
      %s53 = scalar_select %p50, %s51, %s52
      %p56 = pneg %p50
      %p57 = scmp.eq.s32.totalorder %s15, 1
      %p58 = por %p56, %p57
      %p59 = scmp.ne.s32.totalorder %s51, %s54
      %p60 = scmp.eq.s32.totalorder %s15, 0
      %p61 = por %p59, %p60
      %p62 = scmp.ne.s32.totalorder %s51, %s54
      %p63 = scmp.eq.s32.totalorder %s20, 1
      %p64 = por %p62, %p63
      %p65 = scmp.ne.s32.totalorder %s54, %s55
      %p66 = scmp.eq.s32.totalorder %s20, 0
      %p67 = por %p65, %p66
      %p68 = scmp.ne.s32.totalorder %s54, %s55
      %p69 = scmp.eq.s32.totalorder %s21, 1
      %p70 = por %p68, %p69
      %p72 = scmp.ne.s32.totalorder %s55, %s71
      %p73 = scmp.eq.s32.totalorder %s21, 0
      %p74 = por %p72, %p73
      %s76 = sadd.s32 %s75, 1
      %p79 = scmp.eq.s32.totalorder %s15, 1
      %p80 = scmp.ne.s32.totalorder %s75, %s77
      %p81 = scmp.eq.s32.totalorder %s15, 0
      %p82 = por %p80, %p81
      %p83 = scmp.ne.s32.totalorder %s75, %s77
      %p84 = scmp.eq.s32.totalorder %s20, 1
      %p85 = por %p83, %p84
      %p86 = scmp.ne.s32.totalorder %s77, %s78
      %p87 = scmp.eq.s32.totalorder %s20, 0
      %p88 = por %p86, %p87
      %p89 = scmp.ne.s32.totalorder %s77, %s78
      %p90 = scmp.eq.s32.totalorder %s21, 1
      %p91 = por %p89, %p90
      %p93 = scmp.ne.s32.totalorder %s78, %s92
      %p94 = scmp.eq.s32.totalorder %s21, 0
      %p95 = por %p93, %p94
      %s97 = sadd.s32 %s96, 1
      %p100 = scmp.eq.s32.totalorder %s15, 1
      %p101 = scmp.ne.s32.totalorder %s96, %s98
      %p102 = scmp.eq.s32.totalorder %s15, 0
      %p103 = por %p101, %p102
      %p104 = scmp.ne.s32.totalorder %s96, %s98
      %p105 = scmp.eq.s32.totalorder %s20, 1
      %p106 = por %p104, %p105
      %p107 = scmp.ne.s32.totalorder %s98, %s99
      %p108 = scmp.eq.s32.totalorder %s20, 0
      %p109 = por %p107, %p108
      %p110 = scmp.ne.s32.totalorder %s98, %s99
      %p111 = scmp.eq.s32.totalorder %s21, 1
      %p112 = por %p110, %p111
      %p114 = scmp.ne.s32.totalorder %s99, %s113
      %p115 = scmp.eq.s32.totalorder %s21, 0
      %p116 = por %p114, %p115
      %s118 = sadd.s32 %s117, 1
      %p121 = scmp.eq.s32.totalorder %s15, 1
      %p122 = scmp.ne.s32.totalorder %s117, %s119
      %p123 = scmp.eq.s32.totalorder %s15, 0
      %p124 = por %p122, %p123
      %p125 = scmp.ne.s32.totalorder %s117, %s119
      %p126 = scmp.eq.s32.totalorder %s20, 1
      %p127 = por %p125, %p126
      %p128 = scmp.ne.s32.totalorder %s119, %s120
      %p129 = scmp.eq.s32.totalorder %s20, 0
      %p130 = por %p128, %p129
      %p131 = scmp.ne.s32.totalorder %s119, %s120
      %p132 = scmp.eq.s32.totalorder %s21, 1
      %p133 = por %p131, %p132
      %p135 = scmp.ne.s32.totalorder %s120, %s134
      %p136 = scmp.eq.s32.totalorder %s21, 0
      %p137 = por %p135, %p136
      %s139 = sadd.s32 %s138, 1
      %p142 = scmp.eq.s32.totalorder %s15, 1
      %p143 = scmp.ne.s32.totalorder %s138, %s140
      %p144 = scmp.eq.s32.totalorder %s15, 0
      %p145 = por %p143, %p144
      %p146 = scmp.ne.s32.totalorder %s138, %s140
      %p147 = scmp.eq.s32.totalorder %s20, 1
      %p148 = por %p146, %p147
      %p149 = scmp.ne.s32.totalorder %s140, %s141
      %p150 = scmp.eq.s32.totalorder %s20, 0
      %p151 = por %p149, %p150
      %p152 = scmp.ne.s32.totalorder %s140, %s141
      %p153 = scmp.eq.s32.totalorder %s21, 1
      %p154 = por %p152, %p153
      %p156 = scmp.ne.s32.totalorder %s141, %s155
      %p157 = scmp.eq.s32.totalorder %s21, 0
      %p158 = por %p156, %p157
      %s159 = ssub.s32 %s15, %s22
      %p160 = scmp.eq.s32.totalorder %s159, 0
      %s162 = sadd.s32 %s161, 1
      %s163 = scalar_select %p160, %s161, %s162
      %p166 = pneg %p160
      %p167 = scmp.eq.s32.totalorder %s15, 1
      %p168 = por %p166, %p167
      %p169 = scmp.ne.s32.totalorder %s161, %s164
      %p170 = scmp.eq.s32.totalorder %s15, 0
      %p171 = por %p169, %p170
      %p172 = scmp.ne.s32.totalorder %s161, %s164
      %p173 = scmp.eq.s32.totalorder %s20, 1
      %p174 = por %p172, %p173
      %p175 = scmp.ne.s32.totalorder %s164, %s165
      %p176 = scmp.eq.s32.totalorder %s20, 0
      %p177 = por %p175, %p176
      %p178 = scmp.ne.s32.totalorder %s164, %s165
      %p179 = scmp.eq.s32.totalorder %s21, 1
      %p180 = por %p178, %p179
      %p182 = scmp.ne.s32.totalorder %s165, %s181
      %p183 = scmp.eq.s32.totalorder %s21, 0
      %p184 = por %p182, %p183
      %p185 = scmp.le.s32.totalorder 1, %s15
      %p186 = scmp.lt.s32.totalorder %s15, 3
      %p187 = pnand %p185, %p186
      %p188 = pneg %p187
      // Predicated region
      $region9: #{tpu_custom_call.1} parent=5 // pred_check
        _
      $region10: #{tpu_custom_call.1} parent=5 // pred_check_branch
        %190 = sbr.rel (%p187) target = $region12
      $region11: #{tpu_custom_call.1} parent=5 // pred_region
        %s191 = ssub.s32 %s15, 1
        // Predicated region
        $region13: #{tpu_custom_call.1} parent=11 // pred_check
          %p192 = pneg %p88
        $region14: #{tpu_custom_call.1} parent=11 // pred_check_branch
          %194 = sbr.rel (%p192) target = $region16
        $region15: #{tpu_custom_call.1} parent=11 // pred_region
          _
        $region16: #{tpu_custom_call.1} parent=11 // pred_fallthru
          _
        // Predicated region
        $region17: #{tpu_custom_call.1} parent=11 // pred_check
          %p195 = pneg %p109
        $region18: #{tpu_custom_call.1} parent=11 // pred_check_branch
          %197 = sbr.rel (%p195) target = $region20
        $region19: #{tpu_custom_call.1} parent=11 // pred_region
          _
        $region20: #{tpu_custom_call.1} parent=11 // pred_fallthru
          _
        // Predicated region
        $region21: #{tpu_custom_call.1} parent=11 // pred_check
          %p198 = pneg %p130
        $region22: #{tpu_custom_call.1} parent=11 // pred_check_branch
          %200 = sbr.rel (%p198) target = $region24
        $region23: #{tpu_custom_call.1} parent=11 // pred_region
          _
        $region24: #{tpu_custom_call.1} parent=11 // pred_fallthru
          _
        // Predicated region
        $region25: #{tpu_custom_call.1} parent=11 // pred_check
          %p201 = pneg %p151
        $region26: #{tpu_custom_call.1} parent=11 // pred_check_branch
          %203 = sbr.rel (%p201) target = $region28
        $region27: #{tpu_custom_call.1} parent=11 // pred_region
          _
        $region28: #{tpu_custom_call.1} parent=11 // pred_fallthru
          _
      $region12: #{tpu_custom_call.1} parent=5 // pred_fallthru
        _
      %p204 = scmp.lt.s32.totalorder %s15, 2
      // Predicated region
      $region29: #{tpu_custom_call.1} parent=5 // pred_check
        %p205 = pneg %p204
      $region30: #{tpu_custom_call.1} parent=5 // pred_check_branch
        %207 = sbr.rel (%p205) target = $region32
      $region31: #{tpu_custom_call.1} parent=5 // pred_region
        // Predicated region
        $region33: #{tpu_custom_call.1} parent=31 // pred_check
          %p208 = pneg %p35
        $region34: #{tpu_custom_call.1} parent=31 // pred_check_branch
          %210 = sbr.rel (%p208) target = $region36
        $region35: #{tpu_custom_call.1} parent=31 // pred_region
          %p211 = scmp.lt.s32.totalorder %s15, 1
          %s212 = scalar_select %p211, %s15, 1
          %s213 = smul.addr %s212, 8
          %s214 = scalar_lea.vmem %s0, %s213
        $region36: #{tpu_custom_call.1} parent=31 // pred_fallthru
          _
        // Predicated region
        $region37: #{tpu_custom_call.1} parent=31 // pred_check
          %p215 = pneg %p61
        $region38: #{tpu_custom_call.1} parent=31 // pred_check_branch
          %217 = sbr.rel (%p215) target = $region40
        $region39: #{tpu_custom_call.1} parent=31 // pred_region
          %p218 = scmp.lt.s32.totalorder %s15, 1
          %s219 = scalar_select %p218, %s15, 1
          %s220 = smul.addr %s219, 8
          %s221 = scalar_lea.vmem %s1, %s220
        $region40: #{tpu_custom_call.1} parent=31 // pred_fallthru
          _
      $region32: #{tpu_custom_call.1} parent=5 // pred_fallthru
        _
      %p222 = scmp.le.s32.totalorder 1, %s15
      %p223 = scmp.lt.s32.totalorder %s15, 3
      %p224 = pnand %p222, %p223
      %p225 = pneg %p224
      // Predicated region
      $region41: #{tpu_custom_call.1} parent=5 // pred_check
        _
      $region42: #{tpu_custom_call.1} parent=5 // pred_check_branch
        %227 = sbr.rel (%p224) target = $region44
      $region43: #{tpu_custom_call.1} parent=5 // pred_region
        %s228 = ssub.s32 %s15, 1
        %p229 = scmp.lt.s32.totalorder %s20, 1
        %s230 = scalar_select %p229, %s20, 1
        %s231 = smul.addr %s230, 8
        %s232 = scalar_lea.vmem %s0, %s231
        %p233 = pneg %p41
        %p234 = pneg %p38
        %p235 = scmp.lt.s32.totalorder %s20, 1
        %s236 = scalar_select %p235, %s20, 1
        %s237 = smul.addr %s236, 8
        %s238 = scalar_lea.vmem %s1, %s237
        %p239 = pneg %p67
        %p240 = pneg %p64
        %p241 = pneg %p88
        %p242 = pneg %p85
        %p243 = pneg %p109
        %p244 = pneg %p106
        %p245 = pneg %p130
        %p246 = pneg %p127
        %p247 = pneg %p151
        %p248 = pneg %p148
        %p249 = pneg %p177
        %p250 = pneg %p174
        %s251 = sand.u32 %s164, 1
        %s252 = scalar_lea.sflag [#allocation3], %s251
        %s253 = sand.u32 %s164, 1
        %s254 = smul.addr %s253, 8
        %s255 = scalar_lea.vmem [#allocation2], %s254
        %p256 = scmp.lt.s32.totalorder %s20, 1
        %s257 = scalar_select %p256, %s20, 1
        %s258 = smul.addr %s257, 8
        %s259 = scalar_lea.vmem %s0, %s258
        %p260 = scmp.lt.s32.totalorder %s20, 1
        %s261 = scalar_select %p260, %s20, 1
        %s262 = smul.addr %s261, 8
        %s263 = scalar_lea.vmem %s1, %s262
        %v265 = vld [vmem:[%s259] sm:$0xff]
        %v266 = vld [vmem:[%s263] sm:$0xff]
        %v267 = vlaneseq
        %v268 = vand.u32 %v267, 127
        %269 = vset.pattern.permute.xlu0 0
        %270 = vperm.xlu0 %269, %v265
        %v271 = vpop.permute.xlu0 %270
        %vm272 = vcmp.eq.s32.totalorder %v268, %v271
        %v273 = vsel %vm272, 1, 0
        %v274 = vcvt.s32.f32 %v273
        %v275 = vpack.c.bf16 %v274, %v274
        %v276 = vld [vmem:[%s2] sm:$0xf]
        %v277 = vld [vmem:[%s2 + $0x4] sm:$0xf]
        %v278 = vld [vmem:[%s2 + $0x8] sm:$0xf]
        %v279 = vld [vmem:[%s2 + $0xc] sm:$0xf]
        %v280 = vld [vmem:[%s2 + $0x10] sm:$0xf]
        %v281 = vld [vmem:[%s2 + $0x14] sm:$0xf]
        %v282 = vld [vmem:[%s2 + $0x18] sm:$0xf]
        %v283 = vld [vmem:[%s2 + $0x1c] sm:$0xf]
        %v284 = vld [vmem:[%s3] sm:$0x3]
        %v285 = vlaneseq
        %v286 = vshrl.u32 %v285, 7
        %v287 = vsub.s32 0, %v286
        %v288 = vrot.slane %v284, %v287
        %vm289 = vcmp.eq.s32.totalorder %v266, 1
        %v290 = vsel %vm289, 1, 0
        %291 = vset.pattern.permute.xlu0 0
        %292 = vperm.xlu0 %291, %v290
        %v293 = vpop.permute.xlu0 %292
        %vm294 = vcmp.eq.s32.totalorder %v293, 1
        %v295 = vlaneseq
        %v296 = vshrl.u32 %v295, 7
        %v297 = vsub.s32 1, %v296
        %v298 = vrot.slane %v284, %v297
        %v299 = vsel %vm294, %v298, %v288
        %v308 = vunpack.c.l.b16 %v276
        %v309 = vunpack.c.l.b16 %v277
        %v310 = vunpack.c.l.b16 %v278
        %v311 = vunpack.c.l.b16 %v279
        %v312 = vunpack.c.l.b16 %v280
        %v313 = vunpack.c.l.b16 %v281
        %v314 = vunpack.c.l.b16 %v282
        %v315 = vunpack.c.l.b16 %v283
        %v316 = vpack.c.b16 %v309, %v308
        %v317 = vpack.c.b16 %v311, %v310
        %v318 = vpack.c.b16 %v313, %v312
        %v319 = vpack.c.b16 %v315, %v314
        %vm324 = vcmask 523264
        %v326 = vsel %vm324, %v275, 0
        %328 = vmatprep.subr.bf16.mxu0 0
        %329 = vmatpush1.bf16.msra.mxu0 %v316
        %330 = vmatprep.subr.bf16.mxu0 0
        %331 = vmatpush1.bf16.msra.mxu0 %v317
        %332 = vmatprep.subr.bf16.mxu0 0
        %333 = vmatpush1.bf16.msra.mxu0 %v318
        %334 = vmatprep.subr.bf16.mxu0 0
        %335 = vmatpush1.bf16.msra.mxu0 %v319
        %336 = vmatprep.subr.bf16.mxu0 0
        %337 = vmatpush1.bf16.msra.mxu0 0
        %338 = vmatprep.subr.bf16.mxu0 0
        %339 = vmatpush1.bf16.msra.mxu0 0
        %340 = vmatprep.subr.bf16.mxu0 0
        %341 = vmatpush1.bf16.msra.mxu0 0
        %342 = vmatprep.subr.bf16.mxu0 0
        %343 = vmatpush1.bf16.msra.mxu0 0
        %344 = vmatprep.subr.bf16.mxu0 0
        %345 = vmatpush1.bf16.msra.mxu0 0
        %346 = vmatprep.subr.bf16.mxu0 0
        %347 = vmatpush1.bf16.msra.mxu0 0
        %348 = vmatprep.subr.bf16.mxu0 0
        %349 = vmatpush1.bf16.msra.mxu0 0
        %350 = vmatprep.subr.bf16.mxu0 0
        %351 = vmatpush1.bf16.msra.mxu0 0
        %352 = vmatprep.subr.bf16.mxu0 0
        %353 = vmatpush1.bf16.msra.mxu0 0
        %354 = vmatprep.subr.bf16.mxu0 0
        %355 = vmatpush1.bf16.msra.mxu0 0
        %356 = vmatprep.subr.bf16.mxu0 0
        %357 = vmatpush1.bf16.msra.mxu0 0
        %358 = vmatprep.subr.bf16.mxu0 0
        %359 = vmatpush1.bf16.msra.mxu0 0
        %360 = vmatprep.mubr.bf16.mxu0 0
        %361 = vmatmul.mubr.bf16.gmra.mrb[0].mxu0 %v326
        %v362 = vpop.f32.mrb[0].mxu0
        %v363 = vadd.f32 %v299, %v362
        %v364 = vpop.f32.mrb[0].mxu0
        %v365 = vpop.f32.mrb[0].mxu0
        %v366 = vpop.f32.mrb[0].mxu0
        %367 = vdwg.mxu0
        %368 = vadd.xlane.f32.xlu0 %v363
        %v369 = vpop.xlane.xlu0 %368
        %v370 = vrcp.pop 128.0
        %v371 = vmul.f32 %v369, %v370
        %v372 = vsub.f32 %v363, %v371
        %v373 = vmul.f32 %v372, %v372
        %374 = vadd.xlane.f32.xlu0 %v373
        %v375 = vpop.xlane.xlu0 %374
        %v376 = vmul.f32 %v375, %v370
        %v377 = vadd.f32 %v376, 1e-05
        %v378 = vrsqrt.pop %v377
        %v379 = vld [vmem:[%s4] sm:$0x1]
        %v381 = vlaneseq
        %v382 = vshrl.u32 %v381, 7
        %v383 = vsub.s32 0, %v382
        %v384 = vrot.slane %v379, %v383
        %v386 = vmul.f32 %v378, %v384
        %v387 = vmul.f32 %v372, %v386
        %v388 = vld [vmem:[%s5] sm:$0x1]
        %v390 = vlaneseq
        %v391 = vshrl.u32 %v390, 7
        %v392 = vsub.s32 0, %v391
        %v393 = vrot.slane %v388, %v392
        %v395 = vadd.f32 %v387, %v393
        %396 = vst [vmem:[%s255] sm:$0xff] %v395
        %s397 = sand.u32 %s164, 1
        %s398 = scalar_lea.sflag [#allocation3], %s397
        %s399 = sand.u32 %s164, 1
        %s400 = smul.addr %s399, 8
        %s401 = scalar_lea.vmem [#allocation2], %s400
        // Predicated region
        $region45: #{tpu_custom_call.1} parent=43 // pred_check
          %p402 = pneg %p174
        $region46: #{tpu_custom_call.1} parent=43 // pred_check_branch
          %404 = sbr.rel (%p402) target = $region48
        $region47: #{tpu_custom_call.1} parent=43 // pred_region
          %s406 = ssub.s32 128, 128
          %407 = vsyncadd %s398, %s406
          %s408 = smul.addr %s20, 128
          %s409 = scalar_lea.hbm %s6, %s408
          %s411 = sshll.u32 %s401, 4
          %s412 = int_to_ptr.vmem [resolvable:$true] %s411
          %414 = dma.vmem_to_hbm [thread:$0]  %s412, 128, %s409, %s398
        $region48: #{tpu_custom_call.1} parent=43 // pred_fallthru
          _
      $region44: #{tpu_custom_call.1} parent=5 // pred_fallthru
        _
      %p415 = scmp.le.s32.totalorder 2, %s15
      // Predicated region
      $region49: #{tpu_custom_call.1} parent=5 // pred_check
        %p416 = pneg %p415
      $region50: #{tpu_custom_call.1} parent=5 // pred_check_branch
        %418 = sbr.rel (%p416) target = $region52
      $region51: #{tpu_custom_call.1} parent=5 // pred_region
        %s419 = ssub.s32 %s15, 2
        // Predicated region
        $region53: #{tpu_custom_call.1} parent=51 // pred_check
          %p420 = pneg %p180
        $region54: #{tpu_custom_call.1} parent=51 // pred_check_branch
          %422 = sbr.rel (%p420) target = $region56
        $region55: #{tpu_custom_call.1} parent=51 // pred_region
          %s423 = sand.u32 %s165, 1
          %s424 = scalar_lea.sflag [#allocation3], %s423
          %s425 = sand.u32 %s165, 1
          %s426 = smul.addr %s425, 8
          %s427 = scalar_lea.vmem [#allocation2], %s426
          %428 = dma.done %s424, 128
        $region56: #{tpu_custom_call.1} parent=51 // pred_fallthru
          _
      $region52: #{tpu_custom_call.1} parent=5 // pred_fallthru
        _
    $region6: #{tpu_custom_call.1} parent=1 // loop_footer
      %s19 = sadd.s32 1, %s15
    $region7: #{tpu_custom_call.1} parent=1 // loop_footer_branch
      %14 = sbr.rel target = $region3
    $region8: #{tpu_custom_call.1} parent=1 // loop_exit
      _
    %429 = vsyncpa [#allocation3], 1
    %s430 = scalar_lea.sflag [#allocation3], 1
    %431 = vsyncpa %s430, 1

</llo_original>
